<compile_context>
chip_gen: v7x
topology: tpu7x:2x2x1
jax: 0.10.0
libtpu: 0.0.40
codegen_flags: <defaults>
</compile_context>

<pallas_src>
import functools

import jax
import jax.numpy as jnp
from jax.experimental import pallas as pl
from jax.experimental.pallas import tpu as pltpu


def _round_up(n: int, m: int) -> int:
    return ((n + m - 1) // m) * m


def _mlp_kernel(x_ref, w_ref, b_ref, out_ref, *, ipad):
    # x_ref:   (tile_m, ipad) f32   unpadded input rows (ipad = round_up(in_dim, 8))
    # w_ref:   (3, L, L)      bf16  [w1 | w2 | fused heads], zero-padded
    # b_ref:   (3, L)         f32   [b1 | b2 | fused head biases], zero-padded
    # out_ref: (tile_m, L)    f32   lane-dense fused-head output
    x = x_ref[...].astype(jnp.bfloat16)

    b1 = b_ref[0:1, :]
    b2 = b_ref[1:2, :]
    bh = b_ref[2:3, :]

    # Layer 1 only contracts over the real input rows (K = ipad, not 128).
    w1 = w_ref[0, :ipad, :]

    # feature_extractor: Linear -> ReLU -> Linear -> ReLU (dropout = identity).
    # bf16 operands, f32 MXU accumulation; bias add / ReLU in f32.
    h1 = jnp.maximum(
        jnp.dot(x, w1, preferred_element_type=jnp.float32) + b1, 0.0)
    h2 = jnp.maximum(
        jnp.dot(h1.astype(jnp.bfloat16), w_ref[1],
                preferred_element_type=jnp.float32) + b2, 0.0)

    # Fused performance / energy / carbon heads in a single MXU pass.
    out_ref[...] = (
        jnp.dot(h2.astype(jnp.bfloat16), w_ref[2],
                preferred_element_type=jnp.float32) + bh
    ).astype(out_ref.dtype)


def pack_params(params):
    """Pack per-layer params into one bf16 weight slab + one f32 bias slab.

    INVARIANT (do not break): all padded rows/columns of the slabs must be
    exactly zero.  h2's padded lanes are only zero because ReLU(0 + 0) == 0,
    and the fused-head matmul relies on zero rows in the padded heads weight.
    Changing the activation, padding init, or bias padding silently corrupts
    the head outputs.
    """
    w1, b1 = params["w1"], params["b1"]          # (in, H),  (1, H)
    w2, b2 = params["w2"], params["b2"]          # (H, H2),  (1, H2)
    wp, bp = params["wp"], params["bp"]          # (H2, O),  (1, O)
    we, be = params["we"], params["be"]          # (H2, 1),  (1, 1)
    wc, bc = params["wc"], params["bc"]          # (H2, 1),  (1, 1)

    in_dim, H = w1.shape
    H2 = w2.shape[1]
    O = wp.shape[1]

    heads_w = jnp.concatenate([wp, we, wc], axis=1)   # (H2, O + 2)
    heads_b = jnp.concatenate([bp, be, bc], axis=1)   # (1,  O + 2)

    L = _round_up(max(H, H2, O + 2, 128), 128)
    ipad = _round_up(in_dim, 8)

    def pad2(a, rows, cols):
        out = jnp.zeros((rows, cols), jnp.float32)
        return out.at[: a.shape[0], : a.shape[1]].set(a.astype(jnp.float32))

    w_slab = jnp.stack(
        [pad2(w1, L, L), pad2(w2, L, L), pad2(heads_w, L, L)], axis=0
    ).astype(jnp.bfloat16)                                               # (3, L, L) bf16
    b_slab = jnp.concatenate(
        [pad2(b1, 1, L), pad2(b2, 1, L), pad2(heads_b, 1, L)], axis=0)   # (3, L) f32

    return {"w": w_slab, "b": b_slab, "dims": (in_dim, ipad, H, H2, O, L)}


def street_light_forward(x, packed):
    """Fused Pallas forward. Returns a dict mirroring the PyTorch module."""
    in_dim, ipad, H, H2, O, L = packed["dims"]
    batch = x.shape[0]

    x = x.astype(jnp.float32)
    if x.shape[1] != ipad:
        # Only needed when in_dim is not a multiple of 8 (not the default 8).
        x = jnp.zeros((batch, ipad), jnp.float32).at[:, :in_dim].set(x)

    # Batch tile: large (amortize ~0.35 us/step overhead) but split so the
    # grid has >= 2 steps whenever batch > 8 -> both TCs busy on v7x.
    # VMEM at tile_m=1024: ~32 KiB x (double-buffered) + ~512 KiB out x2
    # + ~100 KiB resident weights — tiny on every generation.
    tile_m = max(8, min(_round_up(pl.cdiv(batch, 2), 8), 1024))
    grid = (pl.cdiv(batch, tile_m),)

    kernel = functools.partial(_mlp_kernel, ipad=ipad)

    out = pl.pallas_call(
        kernel,
        out_shape=jax.ShapeDtypeStruct((batch, L), jnp.float32),
        grid_spec=pltpu.PrefetchScalarGridSpec(
            num_scalar_prefetch=0,
            grid=grid,
            in_specs=[
                # x tile: last block dim == full array dim (legal, < 128).
                pl.BlockSpec((tile_m, ipad), lambda i: (i, 0)),
                # Resident weight/bias slabs: constant index_map -> fetched
                # once; single buffer (no point double-buffering them).
                pl.BlockSpec((3, L, L), lambda i: (0, 0, 0),
                             pipeline_mode=pl.Buffered(1)),
                pl.BlockSpec((3, L), lambda i: (0, 0),
                             pipeline_mode=pl.Buffered(1)),
            ],
            out_specs=pl.BlockSpec((tile_m, L), lambda i: (i, 0)),
        ),
        compiler_params=pltpu.CompilerParams(
            dimension_semantics=("parallel",)),
    )(x, packed["w"], packed["b"])

    return {
        "performance": out[:, :O],
        "energy_consumption": out[:, O:O + 1],
        "carbon_footprint": out[:, O + 1:O + 2],
    }


def init_params(key, input_dim=8, hidden_dim=128, output_dim=3):
    """Deterministic synthetic parameter init (shapes match the PyTorch module).

    Weights are stored as (in_features, out_features) so y = x @ W + b.
    """
    half = hidden_dim // 2
    keys = jax.random.split(key, 10)

    def lin(kw, kb, fan_in, fan_out):
        bound = 1.0 / jnp.sqrt(fan_in)
        w = jax.random.uniform(kw, (fan_in, fan_out), jnp.float32, -bound, bound)
        b = jax.random.uniform(kb, (1, fan_out), jnp.float32, -bound, bound)
        return w, b

    w1, b1 = lin(keys[0], keys[1], input_dim, hidden_dim)
    w2, b2 = lin(keys[2], keys[3], hidden_dim, half)
    wp, bp = lin(keys[4], keys[5], half, output_dim)
    we, be = lin(keys[6], keys[7], half, 1)
    wc, bc = lin(keys[8], keys[9], half, 1)
    return {
        "w1": w1, "b1": b1,
        "w2": w2, "b2": b2,
        "wp": wp, "bp": bp,
        "we": we, "be": be,
        "wc": wc, "bc": bc,
    }


def _reference_forward(x, p):
    """Plain-JAX f32 reference for a numerical sanity check."""
    h1 = jnp.maximum(x @ p["w1"] + p["b1"], 0.0)
    h2 = jnp.maximum(h1 @ p["w2"] + p["b2"], 0.0)
    return {
        "performance": h2 @ p["wp"] + p["bp"],
        "energy_consumption": h2 @ p["we"] + p["be"],
        "carbon_footprint": h2 @ p["wc"] + p["bc"],
    }


if __name__ == "__main__":
    key = jax.random.PRNGKey(0)
    k_params, k_x = jax.random.split(key)

    input_dim, hidden_dim, output_dim = 8, 128, 3
    batch = 16

    params = init_params(k_params, input_dim, hidden_dim, output_dim)
    packed = pack_params(params)
    x = jax.random.normal(k_x, (batch, input_dim), jnp.float32)

    out = street_light_forward(x, packed)
    out = jax.block_until_ready(out)

    ref = _reference_forward(x, params)
    # Tolerance relaxed vs the pure-f32 version: weights/activations feed the
    # MXU in bf16 (f32 accumulation), so expect ~1e-2 relative agreement.
    for k in ("performance", "energy_consumption", "carbon_footprint"):
        assert out[k].shape == ref[k].shape, (k, out[k].shape, ref[k].shape)
        assert jnp.allclose(out[k], ref[k], atol=5e-2, rtol=5e-2), k

    print("KERNEL_OK")
</pallas_src>

<mosaic_0001>
module attributes {stable_mosaic.version = 11 : i64} {
  func.func @_mlp_kernel(%arg0: i32, %arg1: memref<8x8xf32, #tpu.memory_space<vmem>>, %arg2: memref<3x128x128xbf16, #tpu.memory_space<vmem>>, %arg3: memref<3x128xf32, #tpu.memory_space<vmem>>, %arg4: memref<8x128xf32, #tpu.memory_space<vmem>>) attributes {dimension_semantics = [#tpu.dimension_semantics<parallel>], iteration_bounds = array<i64: 2>, scalar_prefetch = 0 : i64, scratch_operands = 0 : i64, tpu.core_type = #tpu.core_type<tc>, window_params = [{transform_indices = @transform_0, window_bounds = array<i64: 8, 8>}, {pipeline_mode = #tpu.pipeline_mode<synchronous>, transform_indices = @transform_1, window_bounds = array<i64: 3, 128, 128>}, {pipeline_mode = #tpu.pipeline_mode<synchronous>, transform_indices = @transform_2, window_bounds = array<i64: 3, 128>}, {transform_indices = @transform_3, window_bounds = array<i64: 8, 128>}]} {
    %c0 = arith.constant 0 : index
    %c0_0 = arith.constant 0 : index
    %0 = vector.load %arg1[%c0, %c0_0] : memref<8x8xf32, #tpu.memory_space<vmem>>, vector<8x8xf32>
    %1 = arith.truncf %0 : vector<8x8xf32> to vector<8x8xbf16>
    %c0_1 = arith.constant 0 : index
    %c0_2 = arith.constant 0 : index
    %2 = vector.load %arg3[%c0_1, %c0_2] : memref<3x128xf32, #tpu.memory_space<vmem>>, vector<1x128xf32>
    %c1 = arith.constant 1 : index
    %c0_3 = arith.constant 0 : index
    %3 = vector.load %arg3[%c1, %c0_3] : memref<3x128xf32, #tpu.memory_space<vmem>>, vector<1x128xf32>
    %c2 = arith.constant 2 : index
    %c0_4 = arith.constant 0 : index
    %4 = vector.load %arg3[%c2, %c0_4] : memref<3x128xf32, #tpu.memory_space<vmem>>, vector<1x128xf32>
    %c0_5 = arith.constant 0 : index
    %c0_6 = arith.constant 0 : index
    %c0_7 = arith.constant 0 : index
    %5 = vector.load %arg2[%c0_5, %c0_6, %c0_7] : memref<3x128x128xbf16, #tpu.memory_space<vmem>>, vector<1x8x128xbf16>
    %6 = vector.shape_cast %5 : vector<1x8x128xbf16> to vector<8x128xbf16>
    %cst = arith.constant dense<0.000000e+00> : vector<8x128xf32>
    %7 = tpu.matmul %1, %6, %cst {dimension_numbers = #tpu.dot_dimension_numbers<[1], [0], [0], [1], [0, 0, 1, 1], [], []>} : vector<8x8xbf16>, vector<8x128xbf16>, vector<8x128xf32> -> vector<8x128xf32>
    %8 = vector.broadcast %2 : vector<1x128xf32> to vector<8x128xf32>
    %9 = arith.addf %7, %8 : vector<8x128xf32>
    %cst_8 = arith.constant 0.000000e+00 : f32
    %10 = vector.broadcast %cst_8 : f32 to vector<8x128xf32>
    %11 = arith.maximumf %9, %10 : vector<8x128xf32>
    %12 = arith.truncf %11 : vector<8x128xf32> to vector<8x128xbf16>
    %c1_9 = arith.constant 1 : index
    %c0_10 = arith.constant 0 : index
    %c0_11 = arith.constant 0 : index
    %13 = vector.load %arg2[%c1_9, %c0_10, %c0_11] : memref<3x128x128xbf16, #tpu.memory_space<vmem>>, vector<1x128x128xbf16>
    %14 = vector.shape_cast %13 : vector<1x128x128xbf16> to vector<128x128xbf16>
    %cst_12 = arith.constant dense<0.000000e+00> : vector<8x128xf32>
    %15 = tpu.matmul %12, %14, %cst_12 {dimension_numbers = #tpu.dot_dimension_numbers<[1], [0], [0], [1], [0, 0, 1, 1], [], []>} : vector<8x128xbf16>, vector<128x128xbf16>, vector<8x128xf32> -> vector<8x128xf32>
    %16 = vector.broadcast %3 : vector<1x128xf32> to vector<8x128xf32>
    %17 = arith.addf %15, %16 : vector<8x128xf32>
    %cst_13 = arith.constant 0.000000e+00 : f32
    %18 = vector.broadcast %cst_13 : f32 to vector<8x128xf32>
    %19 = arith.maximumf %17, %18 : vector<8x128xf32>
    %20 = arith.truncf %19 : vector<8x128xf32> to vector<8x128xbf16>
    %c2_14 = arith.constant 2 : index
    %c0_15 = arith.constant 0 : index
    %c0_16 = arith.constant 0 : index
    %21 = vector.load %arg2[%c2_14, %c0_15, %c0_16] : memref<3x128x128xbf16, #tpu.memory_space<vmem>>, vector<1x128x128xbf16>
    %22 = vector.shape_cast %21 : vector<1x128x128xbf16> to vector<128x128xbf16>
    %cst_17 = arith.constant dense<0.000000e+00> : vector<8x128xf32>
    %23 = tpu.matmul %20, %22, %cst_17 {dimension_numbers = #tpu.dot_dimension_numbers<[1], [0], [0], [1], [0, 0, 1, 1], [], []>} : vector<8x128xbf16>, vector<128x128xbf16>, vector<8x128xf32> -> vector<8x128xf32>
    %24 = vector.broadcast %4 : vector<1x128xf32> to vector<8x128xf32>
    %25 = arith.addf %23, %24 : vector<8x128xf32>
    %c0_18 = arith.constant 0 : index
    %c0_19 = arith.constant 0 : index
    %26 = vector.load %arg4[%c0_18, %c0_19] : memref<8x128xf32, #tpu.memory_space<vmem>>, vector<8x128xf32>
    tpu.vector_store %arg4[%c0_18, %c0_19], %25 {strides = array<i32>} : memref<8x128xf32, #tpu.memory_space<vmem>>, vector<8x128xf32>,
    return
  }
  func.func @transform_0(%arg0: i32) -> (i32, i32) {
    %c0_i32 = arith.constant 0 : i32
    %c0_i32_0 = arith.constant 0 : i32
    return %arg0, %c0_i32 : i32, i32
  }
  func.func @transform_1(%arg0: i32) -> (i32, i32, i32) {
    %c0_i32 = arith.constant 0 : i32
    %c0_i32_0 = arith.constant 0 : i32
    %c0_i32_1 = arith.constant 0 : i32
    %c0_i32_2 = arith.constant 0 : i32
    return %c0_i32, %c0_i32_0, %c0_i32_1 : i32, i32, i32
  }
  func.func @transform_2(%arg0: i32) -> (i32, i32) {
    %c0_i32 = arith.constant 0 : i32
    %c0_i32_0 = arith.constant 0 : i32
    %c0_i32_1 = arith.constant 0 : i32
    return %c0_i32, %c0_i32_0 : i32, i32
  }
  func.func @transform_3(%arg0: i32) -> (i32, i32) {
    %c0_i32 = arith.constant 0 : i32
    %c0_i32_0 = arith.constant 0 : i32
    return %arg0, %c0_i32 : i32, i32
  }
}

</mosaic_0001>

<llo_original>
// kernel: tpu_custom_call.1
$region0: #{tpu_custom_call.1}
  #allocation0 [shape = 'u32[]', space=smem, size = 0x4, offset = 0x4, fixed_abs, tag = 'smem constant byte address 0x4 - core index']
  #allocation1 [shape = 'u32[144,128]{1,0:T(1,128)}', space=vmem, size = 0x12000, scoped, tag = 'internal scratch']
  %s0 = inlined_call_operand.vmem [shape: f32[16,8], index: 0, kind: input, shape index: {}]
  %s1 = inlined_call_operand.hbm [shape: bf16[3,128,128], index: 1, kind: input, shape index: {}]
  %s2 = inlined_call_operand.vmem [shape: f32[3,128], index: 2, kind: input, shape index: {}]
  %s3 = inlined_call_operand.hbm [shape: f32[16,128], index: 3, kind: output, shape index: {}]
  %s4 = sld [smem:[#allocation0]]
  $region49: #{tpu_custom_call.1} parent=0
    _
  %s6 = ssub.s32 1, %s4
  %s7 = scalar_select 0, %s6, %s4
  $region1: #{tpu_custom_call.1} parent=0
    #allocation2 [shape = 'u8[98304]{0}', space=vmem, size = 0x18000, scoped, tag = 'input window, operand 1, single buffered']
    #allocation3 [shape = 's32[2]{0}', space=sflag, size = 0x8, scoped, tag = 'scoped memory for tpu_custom_call.1']
    #allocation4 [shape = 's32[2]{0}', space=sflag, size = 0x8, scoped, tag = 'scoped memory for tpu_custom_call.1']
    #allocation5 [shape = 'u8[8192]{0}', space=vmem, size = 0x2000, scoped, tag = 'output window, operand 0']
    %8 = vsyncpa [#allocation3], 0
    %9 = vsyncpa [#allocation4], 0
    %s10 = scalar_lea.sflag [#allocation4], 1
    %11 = vsyncpa %s10, 0
    loop: start=0, step=1, limit=4
    $region2: #{tpu_custom_call.1} parent=1 // loop_pre_header
      _
    $region3: #{tpu_custom_call.1} parent=1 // loop_header
      %s13 = sphi 0, %s17
      %p14 = scmp.ge.s32.totalorder %s13, 4
      %s23 = sphi 0, %s25
      %s26 = sphi 0, %s23
      %s27 = sphi 0, %s26
      %s43 = sphi 0, %s27
      %s47 = sphi 0, %s47
      %s49 = sphi 0, %s47
      %s50 = sphi 0, %s49
      %s64 = sphi 0, %s50
      %s68 = sphi 0, %s68
      %s70 = sphi 0, %s68
      %s71 = sphi 0, %s70
      %s85 = sphi 0, %s71
      %s91 = sphi 0, %s93
      %s94 = sphi 0, %s91
      %s95 = sphi 0, %s94
      %s111 = sphi 0, %s95
    $region4: #{tpu_custom_call.1} parent=1 // loop_header_branch
      %16 = sbr.rel (%p14) target = $region8
    $region5: #{tpu_custom_call.1} parent=1 // loop_body
      %s18 = ssub.s32 %s13, 1
      %s19 = ssub.s32 %s13, 2
      %s20 = sadd.s32 %s13, 1
      %s21 = ssub.s32 %s13, %s20
      %p22 = scmp.eq.s32.totalorder %s21, 0
      %s24 = sadd.s32 %s23, 1
      %s25 = scalar_select %p22, %s23, %s24
      %p28 = pneg %p22
      %p29 = scmp.eq.s32.totalorder %s13, 1
      %p30 = por %p28, %p29
      %p31 = scmp.ne.s32.totalorder %s23, %s26
      %p32 = scmp.eq.s32.totalorder %s13, 0
      %p33 = por %p31, %p32
      %p34 = scmp.ne.s32.totalorder %s23, %s26
      %p35 = scmp.eq.s32.totalorder %s18, 1
      %p36 = por %p34, %p35
      %p37 = scmp.ne.s32.totalorder %s26, %s27
      %p38 = scmp.eq.s32.totalorder %s18, 0
      %p39 = por %p37, %p38
      %p40 = scmp.ne.s32.totalorder %s26, %s27
      %p41 = scmp.eq.s32.totalorder %s19, 1
      %p42 = por %p40, %p41
      %p44 = scmp.ne.s32.totalorder %s27, %s43
      %p45 = scmp.eq.s32.totalorder %s19, 0
      %p46 = por %p44, %p45
      %s48 = sadd.s32 %s47, 1
      %p51 = scmp.eq.s32.totalorder %s13, 1
      %p52 = scmp.ne.s32.totalorder %s47, %s49
      %p53 = scmp.eq.s32.totalorder %s13, 0
      %p54 = por %p52, %p53
      %p55 = scmp.ne.s32.totalorder %s47, %s49
      %p56 = scmp.eq.s32.totalorder %s18, 1
      %p57 = por %p55, %p56
      %p58 = scmp.ne.s32.totalorder %s49, %s50
      %p59 = scmp.eq.s32.totalorder %s18, 0
      %p60 = por %p58, %p59
      %p61 = scmp.ne.s32.totalorder %s49, %s50
      %p62 = scmp.eq.s32.totalorder %s19, 1
      %p63 = por %p61, %p62
      %p65 = scmp.ne.s32.totalorder %s50, %s64
      %p66 = scmp.eq.s32.totalorder %s19, 0
      %p67 = por %p65, %p66
      %s69 = sadd.s32 %s68, 1
      %p72 = scmp.eq.s32.totalorder %s13, 1
      %p73 = scmp.ne.s32.totalorder %s68, %s70
      %p74 = scmp.eq.s32.totalorder %s13, 0
      %p75 = por %p73, %p74
      %p76 = scmp.ne.s32.totalorder %s68, %s70
      %p77 = scmp.eq.s32.totalorder %s18, 1
      %p78 = por %p76, %p77
      %p79 = scmp.ne.s32.totalorder %s70, %s71
      %p80 = scmp.eq.s32.totalorder %s18, 0
      %p81 = por %p79, %p80
      %p82 = scmp.ne.s32.totalorder %s70, %s71
      %p83 = scmp.eq.s32.totalorder %s19, 1
      %p84 = por %p82, %p83
      %p86 = scmp.ne.s32.totalorder %s71, %s85
      %p87 = scmp.eq.s32.totalorder %s19, 0
      %p88 = por %p86, %p87
      %s89 = ssub.s32 %s13, %s20
      %p90 = scmp.eq.s32.totalorder %s89, 0
      %s92 = sadd.s32 %s91, 1
      %s93 = scalar_select %p90, %s91, %s92
      %p96 = pneg %p90
      %p97 = scmp.eq.s32.totalorder %s13, 1
      %p98 = por %p96, %p97
      %p99 = scmp.ne.s32.totalorder %s91, %s94
      %p100 = scmp.eq.s32.totalorder %s13, 0
      %p101 = por %p99, %p100
      %p102 = scmp.ne.s32.totalorder %s91, %s94
      %p103 = scmp.eq.s32.totalorder %s18, 1
      %p104 = por %p102, %p103
      %p105 = scmp.ne.s32.totalorder %s94, %s95
      %p106 = scmp.eq.s32.totalorder %s18, 0
      %p107 = por %p105, %p106
      %p108 = scmp.ne.s32.totalorder %s94, %s95
      %p109 = scmp.eq.s32.totalorder %s19, 1
      %p110 = por %p108, %p109
      %p112 = scmp.ne.s32.totalorder %s95, %s111
      %p113 = scmp.eq.s32.totalorder %s19, 0
      %p114 = por %p112, %p113
      %p115 = scmp.le.s32.totalorder 1, %s13
      %p116 = scmp.lt.s32.totalorder %s13, 3
      %p117 = pnand %p115, %p116
      %p118 = pneg %p117
      // Predicated region
      $region9: #{tpu_custom_call.1} parent=5 // pred_check
        _
      $region10: #{tpu_custom_call.1} parent=5 // pred_check_branch
        %120 = sbr.rel (%p117) target = $region12
      $region11: #{tpu_custom_call.1} parent=5 // pred_region
        %s121 = ssub.s32 %s13, 1
        // Predicated region
        $region13: #{tpu_custom_call.1} parent=11 // pred_check
          %p122 = pneg %p60
        $region14: #{tpu_custom_call.1} parent=11 // pred_check_branch
          %124 = sbr.rel (%p122) target = $region16
        $region15: #{tpu_custom_call.1} parent=11 // pred_region
          %s126 = ssub.s32 3072, 3072
          %127 = vsyncadd [#allocation3], %s126
          %s128 = sshll.u32 [#allocation2], 4
          %s129 = int_to_ptr.vmem [resolvable:$true] %s128
          %134 = dma.hbm_to_vmem [thread:$0]  %s1, 3072, %s129, [#allocation3], 64, 64, 4
        $region16: #{tpu_custom_call.1} parent=11 // pred_fallthru
          _
        // Predicated region
        $region17: #{tpu_custom_call.1} parent=11 // pred_check
          %p135 = pneg %p81
        $region18: #{tpu_custom_call.1} parent=11 // pred_check_branch
          %137 = sbr.rel (%p135) target = $region20
        $region19: #{tpu_custom_call.1} parent=11 // pred_region
          _
        $region20: #{tpu_custom_call.1} parent=11 // pred_fallthru
          _
      $region12: #{tpu_custom_call.1} parent=5 // pred_fallthru
        _
      %p138 = scmp.lt.s32.totalorder %s13, 2
      // Predicated region
      $region21: #{tpu_custom_call.1} parent=5 // pred_check
        %p139 = pneg %p138
      $region22: #{tpu_custom_call.1} parent=5 // pred_check_branch
        %141 = sbr.rel (%p139) target = $region24
      $region23: #{tpu_custom_call.1} parent=5 // pred_region
        // Predicated region
        $region25: #{tpu_custom_call.1} parent=23 // pred_check
          %p142 = pneg %p33
        $region26: #{tpu_custom_call.1} parent=23 // pred_check_branch
          %144 = sbr.rel (%p142) target = $region28
        $region27: #{tpu_custom_call.1} parent=23 // pred_region
          %p145 = scmp.lt.s32.totalorder %s13, 1
          %s146 = scalar_select %p145, %s13, 1
          %s147 = smul.addr %s146, 8
          %s148 = scalar_lea.vmem %s0, %s147
        $region28: #{tpu_custom_call.1} parent=23 // pred_fallthru
          _
      $region24: #{tpu_custom_call.1} parent=5 // pred_fallthru
        _
      %p149 = scmp.le.s32.totalorder 1, %s13
      %p150 = scmp.lt.s32.totalorder %s13, 3
      %p151 = pnand %p149, %p150
      %p152 = pneg %p151
      // Predicated region
      $region29: #{tpu_custom_call.1} parent=5 // pred_check
        _
      $region30: #{tpu_custom_call.1} parent=5 // pred_check_branch
        %154 = sbr.rel (%p151) target = $region32
      $region31: #{tpu_custom_call.1} parent=5 // pred_region
        %s155 = ssub.s32 %s13, 1
        // Predicated region
        $region33: #{tpu_custom_call.1} parent=31 // pred_check
          %p156 = pneg %p60
        $region34: #{tpu_custom_call.1} parent=31 // pred_check_branch
          %158 = sbr.rel (%p156) target = $region36
        $region35: #{tpu_custom_call.1} parent=31 // pred_region
          %159 = dma.done [#allocation3], 3072
        $region36: #{tpu_custom_call.1} parent=31 // pred_fallthru
          _
        %p160 = scmp.lt.s32.totalorder %s18, 1
        %s161 = scalar_select %p160, %s18, 1
        %s162 = smul.addr %s161, 8
        %s163 = scalar_lea.vmem %s0, %s162
        %p164 = pneg %p39
        %p165 = pneg %p36
        %p166 = pneg %p60
        %p167 = pneg %p57
        %p168 = pneg %p81
        %p169 = pneg %p78
        %p170 = pneg %p107
        %p171 = pneg %p104
        %s172 = sand.u32 %s94, 1
        %s173 = scalar_lea.sflag [#allocation4], %s172
        %s174 = sand.u32 %s94, 1
        %s175 = smul.addr %s174, 8
        %s176 = scalar_lea.vmem [#allocation5], %s175
        %p177 = scmp.lt.s32.totalorder %s18, 1
        %s178 = scalar_select %p177, %s18, 1
        %s179 = smul.addr %s178, 8
        %s180 = scalar_lea.vmem %s0, %s179
        %v182 = vld [vmem:[%s180] sm:$0xff]
        %v183 = vpack.c.bf16 %v182, %v182
        %v184 = vld [vmem:[%s2] sm:$0x1]
        %v185 = vld [vmem:[%s2 + $0x1] sm:$0x1]
        %v186 = vld [vmem:[%s2 + $0x2] sm:$0x1]
        %v187 = vld [vmem:[#allocation2] sm:$0xf]
        %v188 = vlaneseq
        %v189 = vshrl.u32 %v188, 7
        %v190 = vsub.s32 0, %v189
        %v191 = vrot.slane %v184, %v190
        %vm192 = vcmask 64512
        %v194 = vsel %vm192, %v183, 0
        %vm196 = vcmask 1043456
        %v198 = vsel %vm196, %v187, 0
        %200 = vmatprep.subr.bf16.mxu0 0
        %201 = vmatpush1.bf16.msra.mxu0 %v198
        %202 = vmatprep.subr.bf16.mxu0 0
        %203 = vmatpush1.bf16.msra.mxu0 0
        %204 = vmatprep.subr.bf16.mxu0 0
        %205 = vmatpush1.bf16.msra.mxu0 0
        %206 = vmatprep.subr.bf16.mxu0 0
        %207 = vmatpush1.bf16.msra.mxu0 0
        %208 = vmatprep.subr.bf16.mxu0 0
        %209 = vmatpush1.bf16.msra.mxu0 0
        %210 = vmatprep.subr.bf16.mxu0 0
        %211 = vmatpush1.bf16.msra.mxu0 0
        %212 = vmatprep.subr.bf16.mxu0 0
        %213 = vmatpush1.bf16.msra.mxu0 0
        %214 = vmatprep.subr.bf16.mxu0 0
        %215 = vmatpush1.bf16.msra.mxu0 0
        %216 = vmatprep.subr.bf16.mxu0 0
        %217 = vmatpush1.bf16.msra.mxu0 0
        %218 = vmatprep.subr.bf16.mxu0 0
        %219 = vmatpush1.bf16.msra.mxu0 0
        %220 = vmatprep.subr.bf16.mxu0 0
        %221 = vmatpush1.bf16.msra.mxu0 0
        %222 = vmatprep.subr.bf16.mxu0 0
        %223 = vmatpush1.bf16.msra.mxu0 0
        %224 = vmatprep.subr.bf16.mxu0 0
        %225 = vmatpush1.bf16.msra.mxu0 0
        %226 = vmatprep.subr.bf16.mxu0 0
        %227 = vmatpush1.bf16.msra.mxu0 0
        %228 = vmatprep.subr.bf16.mxu0 0
        %229 = vmatpush1.bf16.msra.mxu0 0
        %230 = vmatprep.subr.bf16.mxu0 0
        %231 = vmatpush1.bf16.msra.mxu0 0
        %232 = vmatprep.mubr.bf16.mxu0 0
        %233 = vmatmul.mubr.bf16.gmra.mrb[0].mxu0 %v194
        %v234 = vpop.f32.mrb[0].mxu0
        %v235 = vadd.f32 %v191, %v234
        %v236 = vpop.f32.mrb[0].mxu0
        %v237 = vpop.f32.mrb[0].mxu0
        %v238 = vpop.f32.mrb[0].mxu0
        %239 = vdwg.mxu0
        %v240 = vmax.f32 %v235, 0.0
        %v241 = vpack.c.bf16 %v240, %v240
        %s242 = scalar_lea.vmem [#allocation2], 64
        %v243 = vld [vmem:[%s242] sm:$0xf]
        %v244 = vld [vmem:[%s242 + $0x4] sm:$0xf]
        %v245 = vld [vmem:[%s242 + $0x8] sm:$0xf]
        %v246 = vld [vmem:[%s242 + $0xc] sm:$0xf]
        %v247 = vld [vmem:[%s242 + $0x10] sm:$0xf]
        %v248 = vld [vmem:[%s242 + $0x14] sm:$0xf]
        %v249 = vld [vmem:[%s242 + $0x18] sm:$0xf]
        %v250 = vld [vmem:[%s242 + $0x1c] sm:$0xf]
        %v251 = vld [vmem:[%s242 + $0x20] sm:$0xf]
        %v252 = vld [vmem:[%s242 + $0x24] sm:$0xf]
        %v253 = vld [vmem:[%s242 + $0x28] sm:$0xf]
        %v254 = vld [vmem:[%s242 + $0x2c] sm:$0xf]
        %v255 = vld [vmem:[%s242 + $0x30] sm:$0xf]
        %v256 = vld [vmem:[%s242 + $0x34] sm:$0xf]
        %v257 = vld [vmem:[%s242 + $0x38] sm:$0xf]
        %v258 = vld [vmem:[%s242 + $0x3c] sm:$0xf]
        %v259 = vlaneseq
        %v260 = vshrl.u32 %v259, 7
        %v261 = vsub.s32 0, %v260
        %v262 = vrot.slane %v185, %v261
        %v279 = vunpack.c.l.b16 %v243
        %v280 = vunpack.c.l.b16 %v244
        %v281 = vunpack.c.l.b16 %v245
        %v282 = vunpack.c.l.b16 %v246
        %v283 = vunpack.c.l.b16 %v247
        %v284 = vunpack.c.l.b16 %v248
        %v285 = vunpack.c.l.b16 %v249
        %v286 = vunpack.c.l.b16 %v250
        %v287 = vunpack.c.l.b16 %v251
        %v288 = vunpack.c.l.b16 %v252
        %v289 = vunpack.c.l.b16 %v253
        %v290 = vunpack.c.l.b16 %v254
        %v291 = vunpack.c.l.b16 %v255
        %v292 = vunpack.c.l.b16 %v256
        %v293 = vunpack.c.l.b16 %v257
        %v294 = vunpack.c.l.b16 %v258
        %v295 = vpack.c.b16 %v280, %v279
        %v296 = vpack.c.b16 %v282, %v281
        %v297 = vpack.c.b16 %v284, %v283
        %v298 = vpack.c.b16 %v286, %v285
        %v299 = vpack.c.b16 %v288, %v287
        %v300 = vpack.c.b16 %v290, %v289
        %v301 = vpack.c.b16 %v292, %v291
        %v302 = vpack.c.b16 %v294, %v293
        %311 = vmatprep.subr.bf16.mxu0 0
        %312 = vmatpush1.bf16.msra.mxu0 %v295
        %313 = vmatprep.subr.bf16.mxu0 0
        %314 = vmatpush1.bf16.msra.mxu0 %v296
        %315 = vmatprep.subr.bf16.mxu0 0
        %316 = vmatpush1.bf16.msra.mxu0 %v297
        %317 = vmatprep.subr.bf16.mxu0 0
        %318 = vmatpush1.bf16.msra.mxu0 %v298
        %319 = vmatprep.subr.bf16.mxu0 0
        %320 = vmatpush1.bf16.msra.mxu0 %v299
        %321 = vmatprep.subr.bf16.mxu0 0
        %322 = vmatpush1.bf16.msra.mxu0 %v300
        %323 = vmatprep.subr.bf16.mxu0 0
        %324 = vmatpush1.bf16.msra.mxu0 %v301
        %325 = vmatprep.subr.bf16.mxu0 0
        %326 = vmatpush1.bf16.msra.mxu0 %v302
        %327 = vmatprep.subr.bf16.mxu0 0
        %328 = vmatpush1.bf16.msra.mxu0 0
        %329 = vmatprep.subr.bf16.mxu0 0
        %330 = vmatpush1.bf16.msra.mxu0 0
        %331 = vmatprep.subr.bf16.mxu0 0
        %332 = vmatpush1.bf16.msra.mxu0 0
        %333 = vmatprep.subr.bf16.mxu0 0
        %334 = vmatpush1.bf16.msra.mxu0 0
        %335 = vmatprep.subr.bf16.mxu0 0
        %336 = vmatpush1.bf16.msra.mxu0 0
        %337 = vmatprep.subr.bf16.mxu0 0
        %338 = vmatpush1.bf16.msra.mxu0 0
        %339 = vmatprep.subr.bf16.mxu0 0
        %340 = vmatpush1.bf16.msra.mxu0 0
        %341 = vmatprep.subr.bf16.mxu0 0
        %342 = vmatpush1.bf16.msra.mxu0 0
        %343 = vmatprep.mubr.bf16.mxu0 0
        %344 = vmatmul.mubr.bf16.gmra.mrb[0].mxu0 %v241
        %v345 = vpop.f32.mrb[0].mxu0
        %v346 = vadd.f32 %v262, %v345
        %v347 = vpop.f32.mrb[0].mxu0
        %v348 = vpop.f32.mrb[0].mxu0
        %v349 = vpop.f32.mrb[0].mxu0
        %350 = vdwg.mxu0
        %v351 = vmax.f32 %v346, 0.0
        %v352 = vpack.c.bf16 %v351, %v351
        %s353 = scalar_lea.vmem [#allocation2], 128
        %v354 = vld [vmem:[%s353] sm:$0xf]
        %v355 = vld [vmem:[%s353 + $0x4] sm:$0xf]
        %v356 = vld [vmem:[%s353 + $0x8] sm:$0xf]
        %v357 = vld [vmem:[%s353 + $0xc] sm:$0xf]
        %v358 = vld [vmem:[%s353 + $0x10] sm:$0xf]
        %v359 = vld [vmem:[%s353 + $0x14] sm:$0xf]
        %v360 = vld [vmem:[%s353 + $0x18] sm:$0xf]
        %v361 = vld [vmem:[%s353 + $0x1c] sm:$0xf]
        %v362 = vld [vmem:[%s353 + $0x20] sm:$0xf]
        %v363 = vld [vmem:[%s353 + $0x24] sm:$0xf]
        %v364 = vld [vmem:[%s353 + $0x28] sm:$0xf]
        %v365 = vld [vmem:[%s353 + $0x2c] sm:$0xf]
        %v366 = vld [vmem:[%s353 + $0x30] sm:$0xf]
        %v367 = vld [vmem:[%s353 + $0x34] sm:$0xf]
        %v368 = vld [vmem:[%s353 + $0x38] sm:$0xf]
        %v369 = vld [vmem:[%s353 + $0x3c] sm:$0xf]
        %v370 = vlaneseq
        %v371 = vshrl.u32 %v370, 7
        %v372 = vsub.s32 0, %v371
        %v373 = vrot.slane %v186, %v372
        %v390 = vunpack.c.l.b16 %v354
        %v391 = vunpack.c.l.b16 %v355
        %v392 = vunpack.c.l.b16 %v356
        %v393 = vunpack.c.l.b16 %v357
        %v394 = vunpack.c.l.b16 %v358
        %v395 = vunpack.c.l.b16 %v359
        %v396 = vunpack.c.l.b16 %v360
        %v397 = vunpack.c.l.b16 %v361
        %v398 = vunpack.c.l.b16 %v362
        %v399 = vunpack.c.l.b16 %v363
        %v400 = vunpack.c.l.b16 %v364
        %v401 = vunpack.c.l.b16 %v365
        %v402 = vunpack.c.l.b16 %v366
        %v403 = vunpack.c.l.b16 %v367
        %v404 = vunpack.c.l.b16 %v368
        %v405 = vunpack.c.l.b16 %v369
        %v406 = vpack.c.b16 %v391, %v390
        %v407 = vpack.c.b16 %v393, %v392
        %v408 = vpack.c.b16 %v395, %v394
        %v409 = vpack.c.b16 %v397, %v396
        %v410 = vpack.c.b16 %v399, %v398
        %v411 = vpack.c.b16 %v401, %v400
        %v412 = vpack.c.b16 %v403, %v402
        %v413 = vpack.c.b16 %v405, %v404
        %422 = vmatprep.subr.bf16.mxu0 0
        %423 = vmatpush1.bf16.msra.mxu0 %v406
        %424 = vmatprep.subr.bf16.mxu0 0
        %425 = vmatpush1.bf16.msra.mxu0 %v407
        %426 = vmatprep.subr.bf16.mxu0 0
        %427 = vmatpush1.bf16.msra.mxu0 %v408
        %428 = vmatprep.subr.bf16.mxu0 0
        %429 = vmatpush1.bf16.msra.mxu0 %v409
        %430 = vmatprep.subr.bf16.mxu0 0
        %431 = vmatpush1.bf16.msra.mxu0 %v410
        %432 = vmatprep.subr.bf16.mxu0 0
        %433 = vmatpush1.bf16.msra.mxu0 %v411
        %434 = vmatprep.subr.bf16.mxu0 0
        %435 = vmatpush1.bf16.msra.mxu0 %v412
        %436 = vmatprep.subr.bf16.mxu0 0
        %437 = vmatpush1.bf16.msra.mxu0 %v413
        %438 = vmatprep.subr.bf16.mxu0 0
        %439 = vmatpush1.bf16.msra.mxu0 0
        %440 = vmatprep.subr.bf16.mxu0 0
        %441 = vmatpush1.bf16.msra.mxu0 0
        %442 = vmatprep.subr.bf16.mxu0 0
        %443 = vmatpush1.bf16.msra.mxu0 0
        %444 = vmatprep.subr.bf16.mxu0 0
        %445 = vmatpush1.bf16.msra.mxu0 0
        %446 = vmatprep.subr.bf16.mxu0 0
        %447 = vmatpush1.bf16.msra.mxu0 0
        %448 = vmatprep.subr.bf16.mxu0 0
        %449 = vmatpush1.bf16.msra.mxu0 0
        %450 = vmatprep.subr.bf16.mxu0 0
        %451 = vmatpush1.bf16.msra.mxu0 0
        %452 = vmatprep.subr.bf16.mxu0 0
        %453 = vmatpush1.bf16.msra.mxu0 0
        %454 = vmatprep.mubr.bf16.mxu0 0
        %455 = vmatmul.mubr.bf16.gmra.mrb[0].mxu0 %v352
        %v456 = vpop.f32.mrb[0].mxu0
        %v457 = vadd.f32 %v373, %v456
        %v458 = vpop.f32.mrb[0].mxu0
        %v459 = vpop.f32.mrb[0].mxu0
        %v460 = vpop.f32.mrb[0].mxu0
        %461 = vdwg.mxu0
        %462 = vst [vmem:[%s176] sm:$0xff] %v457
        %s463 = sand.u32 %s94, 1
        %s464 = scalar_lea.sflag [#allocation4], %s463
        %s465 = sand.u32 %s94, 1
        %s466 = smul.addr %s465, 8
        %s467 = scalar_lea.vmem [#allocation5], %s466
        // Predicated region
        $region37: #{tpu_custom_call.1} parent=31 // pred_check
          %p468 = pneg %p104
        $region38: #{tpu_custom_call.1} parent=31 // pred_check_branch
          %470 = sbr.rel (%p468) target = $region40
        $region39: #{tpu_custom_call.1} parent=31 // pred_region
          %s472 = ssub.s32 128, 128
          %473 = vsyncadd %s464, %s472
          %s474 = smul.addr %s18, 128
          %s475 = scalar_lea.hbm %s3, %s474
          %s477 = sshll.u32 %s467, 4
          %s478 = int_to_ptr.vmem [resolvable:$true] %s477
          %480 = dma.vmem_to_hbm [thread:$0]  %s478, 128, %s475, %s464
        $region40: #{tpu_custom_call.1} parent=31 // pred_fallthru
          _
      $region32: #{tpu_custom_call.1} parent=5 // pred_fallthru
        _
      %p481 = scmp.le.s32.totalorder 2, %s13
      // Predicated region
      $region41: #{tpu_custom_call.1} parent=5 // pred_check
        %p482 = pneg %p481
      $region42: #{tpu_custom_call.1} parent=5 // pred_check_branch
        %484 = sbr.rel (%p482) target = $region44
      $region43: #{tpu_custom_call.1} parent=5 // pred_region
        %s485 = ssub.s32 %s13, 2
        // Predicated region
        $region45: #{tpu_custom_call.1} parent=43 // pred_check
          %p486 = pneg %p110
        $region46: #{tpu_custom_call.1} parent=43 // pred_check_branch
          %488 = sbr.rel (%p486) target = $region48
        $region47: #{tpu_custom_call.1} parent=43 // pred_region
          %s489 = sand.u32 %s95, 1
          %s490 = scalar_lea.sflag [#allocation4], %s489
          %s491 = sand.u32 %s95, 1
          %s492 = smul.addr %s491, 8
          %s493 = scalar_lea.vmem [#allocation5], %s492
          %494 = dma.done %s490, 128
        $region48: #{tpu_custom_call.1} parent=43 // pred_fallthru
          _
      $region44: #{tpu_custom_call.1} parent=5 // pred_fallthru
        _
    $region6: #{tpu_custom_call.1} parent=1 // loop_footer
      %s17 = sadd.s32 1, %s13
    $region7: #{tpu_custom_call.1} parent=1 // loop_footer_branch
      %12 = sbr.rel target = $region3
    $region8: #{tpu_custom_call.1} parent=1 // loop_exit
      _
    %495 = vsyncpa [#allocation3], 1
    %s496 = scalar_lea.sflag [#allocation3], 1
    %497 = vsyncpa %s496, 1
    %498 = vsyncpa [#allocation4], 1
    %s499 = scalar_lea.sflag [#allocation4], 1
    %500 = vsyncpa %s499, 1

</llo_original>
